<compile_context>
chip_gen: v7x
topology: tpu7x:2x2x1
jax: 0.10.0
libtpu: 0.0.40
codegen_flags: <defaults>
</compile_context>

<pallas_src>
import jax
import jax.numpy as jnp
import numpy as np
from jax.experimental import pallas as pl
from jax.experimental.pallas import tpu as pltpu


def _round_up(x: int, m: int) -> int:
    return ((x + m - 1) // m) * m


def _make_embedding_dropout_kernel(vocab_size: int, tile_rows: int):
    """Kernel closed over static vocab size and row-tile size."""

    def kernel(ids_ref, emb_ref, mask_ref, out_ref):
        # ids_ref : (tile_rows, 1)  int32   token id per flattened (b, s) row
        # emb_ref : (V, Dp)         float32 embedding table (VMEM resident)
        # mask_ref: (tile_rows, Dp) float32 per-row variational-dropout mask
        # out_ref : (tile_rows, Dp) float32
        ids = ids_ref[...]                                          # (T, 1)
        col = jax.lax.broadcasted_iota(jnp.int32,
                                       (tile_rows, vocab_size), 1)  # (T, V)
        one_hot = (col == ids).astype(jnp.float32)                  # (T, V)
        # Row gather as one MXU matmul; HIGHEST keeps full f32 accuracy so the
        # gathered rows are bit-accurate (only one nonzero term per row).
        gathered = jnp.dot(one_hot, emb_ref[...],
                           preferred_element_type=jnp.float32,
                           precision=jax.lax.Precision.HIGHEST)     # (T, Dp)
        out_ref[...] = gathered * mask_ref[...]

    return kernel


def embedding_layer_forward(x, emb_weight, drop_mask, *, max_tile_rows=512):
    """Pallas forward of ESIM's EmbeddingLayer:  drop(embedding(x)).

    x          : (B, S) int32 token ids
    emb_weight : (V, D) float32 embedding table
    drop_mask  : (B, D) float32 variational-dropout mask (incl. 1/(1-p) scale)
    returns    : (B, S, D) float32
    """
    B, S = x.shape
    V, D = emb_weight.shape
    N = B * S
    LANES = 128

    # Lane-dense feature dim: pad D up to a multiple of 128 (zeros), slice out
    # the logical columns at the end.
    Dp = _round_up(D, LANES)

    # Row tiling: big tiles amortize per-grid-step overhead; single step for
    # small problems.  Tile rows kept a multiple of 8 (sublane constraint).
    if N >= max_tile_rows:
        tn = max_tile_rows
    else:
        tn = _round_up(max(N, 8), 8)
    Np = _round_up(N, tn)
    grid = (Np // tn,)

    # Flatten (B, S) -> (N, 1) ids; pad rows with 0 (harmless: padded rows are
    # sliced away and a valid id is gathered anyway).
    ids = x.reshape(N).astype(jnp.int32)
    ids = jnp.pad(ids, (0, Np - N))[:, None]                       # (Np, 1)

    # Zero-pad the table columns and expand the per-batch mask to per-row.
    emb_p = jnp.pad(emb_weight.astype(jnp.float32), ((0, 0), (0, Dp - D)))
    mask_rows = jnp.repeat(drop_mask.astype(jnp.float32), S, axis=0)  # (N, D)
    mask_rows = jnp.pad(mask_rows, ((0, Np - N), (0, Dp - D)))        # (Np,Dp)

    out = pl.pallas_call(
        _make_embedding_dropout_kernel(V, tn),
        out_shape=jax.ShapeDtypeStruct((Np, Dp), jnp.float32),
        grid_spec=pltpu.PrefetchScalarGridSpec(
            num_scalar_prefetch=0,
            grid=grid,
            in_specs=[
                # token ids for this row tile
                pl.BlockSpec((tn, 1), lambda i: (i, 0)),
                # whole embedding table resident in VMEM (small vocab path)
                pl.BlockSpec((V, Dp), lambda i: (0, 0)),
                # per-row dropout mask tile
                pl.BlockSpec((tn, Dp), lambda i: (i, 0)),
            ],
            out_specs=pl.BlockSpec((tn, Dp), lambda i: (i, 0)),
        ),
        compiler_params=pltpu.CompilerParams(
            dimension_semantics=("parallel",)),
    )(ids, emb_p, mask_rows)

    return out[:N, :D].reshape(B, S, D)


def make_variational_dropout_mask(key, batch, dim, p, training=True):
    """Replicates F.dropout(ones(B, D), p, training) deterministically."""
    if not training or p == 0.0:
        return jnp.ones((batch, dim), jnp.float32)
    keep = jax.random.bernoulli(key, 1.0 - p, (batch, dim))
    return keep.astype(jnp.float32) / (1.0 - p)


if __name__ == "__main__":
    # Small shapes consistent with the module: vocab=100, embedding_dim=32,
    # batch=2, seq=8.
    VOCAB, DIM = 100, 32
    B, S = 2, 8
    P_DROP = 0.5

    key = jax.random.PRNGKey(0)
    k_emb, k_ids, k_drop = jax.random.split(key, 3)

    # nn.Embedding default init: N(0, 1)
    emb_weight = jax.random.normal(k_emb, (VOCAB, DIM), dtype=jnp.float32)
    x = jax.random.randint(k_ids, (B, S), 0, VOCAB, dtype=jnp.int32)
    drop_mask = make_variational_dropout_mask(k_drop, B, DIM, P_DROP,
                                              training=True)

    out = embedding_layer_forward(x, emb_weight, drop_mask)
    out = jax.block_until_ready(out)

    # Pure-JAX reference: drop_mask.unsqueeze(1) * embedding(x)
    ref = drop_mask[:, None, :] * emb_weight[x]
    np.testing.assert_allclose(np.asarray(out), np.asarray(ref),
                               rtol=1e-5, atol=1e-6)

    print("KERNEL_OK")
</pallas_src>

<mosaic_0001>
module attributes {stable_mosaic.version = 11 : i64} {
  func.func @kernel(%arg0: i32, %arg1: memref<16x1xi32, #tpu.memory_space<vmem>>, %arg2: memref<100x128xf32, #tpu.memory_space<vmem>>, %arg3: memref<16x128xf32, #tpu.memory_space<vmem>>, %arg4: memref<16x128xf32, #tpu.memory_space<vmem>>) attributes {dimension_semantics = [#tpu.dimension_semantics<parallel>], iteration_bounds = array<i64: 1>, scalar_prefetch = 0 : i64, scratch_operands = 0 : i64, tpu.core_type = #tpu.core_type<tc>, window_params = [{transform_indices = @transform_0, window_bounds = array<i64: 16, 1>}, {pipeline_mode = #tpu.pipeline_mode<synchronous>, transform_indices = @transform_1, window_bounds = array<i64: 100, 128>}, {transform_indices = @transform_2, window_bounds = array<i64: 16, 128>}, {transform_indices = @transform_3, window_bounds = array<i64: 16, 128>}]} {
    %c0 = arith.constant 0 : index
    %c0_0 = arith.constant 0 : index
    %0 = vector.load %arg1[%c0, %c0_0] : memref<16x1xi32, #tpu.memory_space<vmem>>, vector<16x1xi32>
    %1 = tpu.iota {dimensions = array<i32: 1>} : vector<16x100xi32>
    %2 = vector.broadcast %0 : vector<16x1xi32> to vector<16x100xi32>
    %3 = arith.cmpi eq, %1, %2 : vector<16x100xi32>
    %4 = arith.extui %3 : vector<16x100xi1> to vector<16x100xi32>
    %5 = arith.sitofp %4 : vector<16x100xi32> to vector<16x100xf32>
    %c0_1 = arith.constant 0 : index
    %c0_2 = arith.constant 0 : index
    %6 = vector.load %arg2[%c0_1, %c0_2] : memref<100x128xf32, #tpu.memory_space<vmem>>, vector<100x128xf32>
    %cst = arith.constant dense<0.000000e+00> : vector<16x128xf32>
    %7 = tpu.matmul %5, %6, %cst {dimension_numbers = #tpu.dot_dimension_numbers<[1], [0], [0], [1], [0, 0, 1, 1], [], []>, precision = #tpu.contract_precision<fp32>} : vector<16x100xf32>, vector<100x128xf32>, vector<16x128xf32> -> vector<16x128xf32>
    %c0_3 = arith.constant 0 : index
    %c0_4 = arith.constant 0 : index
    %8 = vector.load %arg3[%c0_3, %c0_4] : memref<16x128xf32, #tpu.memory_space<vmem>>, vector<16x128xf32>
    %9 = arith.mulf %7, %8 : vector<16x128xf32>
    %c0_5 = arith.constant 0 : index
    %c0_6 = arith.constant 0 : index
    %10 = vector.load %arg4[%c0_5, %c0_6] : memref<16x128xf32, #tpu.memory_space<vmem>>, vector<16x128xf32>
    tpu.vector_store %arg4[%c0_5, %c0_6], %9 {strides = array<i32>} : memref<16x128xf32, #tpu.memory_space<vmem>>, vector<16x128xf32>,
    return
  }
  func.func @transform_0(%arg0: i32) -> (i32, i32) {
    %c0_i32 = arith.constant 0 : i32
    %c0_i32_0 = arith.constant 0 : i32
    return %arg0, %c0_i32 : i32, i32
  }
  func.func @transform_1(%arg0: i32) -> (i32, i32) {
    %c0_i32 = arith.constant 0 : i32
    %c0_i32_0 = arith.constant 0 : i32
    %c0_i32_1 = arith.constant 0 : i32
    return %c0_i32, %c0_i32_0 : i32, i32
  }
  func.func @transform_2(%arg0: i32) -> (i32, i32) {
    %c0_i32 = arith.constant 0 : i32
    %c0_i32_0 = arith.constant 0 : i32
    return %arg0, %c0_i32 : i32, i32
  }
  func.func @transform_3(%arg0: i32) -> (i32, i32) {
    %c0_i32 = arith.constant 0 : i32
    %c0_i32_0 = arith.constant 0 : i32
    return %arg0, %c0_i32 : i32, i32
  }
}

</mosaic_0001>

<llo_original>
// kernel: tpu_custom_call.1
$region0: #{tpu_custom_call.1}
  #allocation0 [shape = 'u32[]', space=smem, size = 0x4, offset = 0x4, fixed_abs, tag = 'smem constant byte address 0x4 - core index']
  #allocation1 [shape = 'u32[144,128]{1,0:T(1,128)}', space=vmem, size = 0x12000, scoped, tag = 'internal scratch']
  %s0 = inlined_call_operand.vmem [shape: s32[16,1], index: 0, kind: input, shape index: {}]
  %s1 = inlined_call_operand.hbm [shape: f32[100,128], index: 1, kind: input, shape index: {}]
  %s2 = inlined_call_operand.vmem [shape: f32[16,128], index: 2, kind: input, shape index: {}]
  %s3 = inlined_call_operand.hbm [shape: f32[16,128], index: 3, kind: output, shape index: {}]
  %s4 = sld [smem:[#allocation0]]
  $region26: #{tpu_custom_call.1} parent=0
    _
  %s6 = ssub.s32 1, %s4
  %s7 = scalar_select 0, %s6, %s4
  $region1: #{tpu_custom_call.1} parent=0
    #allocation2 [shape = 'u8[53248]{0}', space=vmem, size = 0xd000, scoped, tag = 'input window, operand 1, single buffered']
    #allocation3 [shape = 's32[1]{0}', space=sflag, size = 0x4, scoped, tag = 'scoped memory for tpu_custom_call.1']
    #allocation4 [shape = 's32[1]{0}', space=sflag, size = 0x4, scoped, tag = 'scoped memory for tpu_custom_call.1']
    #allocation5 [shape = 'u8[8192]{0}', space=vmem, size = 0x2000, scoped, tag = 'output window, operand 0, single buffered']
    %8 = vsyncpa [#allocation3], 0
    %9 = vsyncpa [#allocation4], 0
    // Predicated region
    $region2: #{tpu_custom_call.1} parent=1 // pred_check
      _
    $region3: #{tpu_custom_call.1} parent=1 // pred_check_branch
      %11 = sbr.rel (0) target = $region5
    $region4: #{tpu_custom_call.1} parent=1 // pred_region
      _
    $region5: #{tpu_custom_call.1} parent=1 // pred_fallthru
      _
    // Predicated region
    $region6: #{tpu_custom_call.1} parent=1 // pred_check
      _
    $region7: #{tpu_custom_call.1} parent=1 // pred_check_branch
      %13 = sbr.rel (0) target = $region9
    $region8: #{tpu_custom_call.1} parent=1 // pred_region
      %s15 = ssub.s32 1664, 1664
      %16 = vsyncadd [#allocation3], %s15
      %s17 = sshll.u32 [#allocation2], 4
      %s18 = int_to_ptr.vmem [resolvable:$true] %s17
      %23 = dma.hbm_to_vmem [thread:$0]  %s1, 1664, %s18, [#allocation3], 128, 128, 8
    $region9: #{tpu_custom_call.1} parent=1 // pred_fallthru
      _
    // Predicated region
    $region10: #{tpu_custom_call.1} parent=1 // pred_check
      _
    $region11: #{tpu_custom_call.1} parent=1 // pred_check_branch
      %25 = sbr.rel (0) target = $region13
    $region12: #{tpu_custom_call.1} parent=1 // pred_region
      _
    $region13: #{tpu_custom_call.1} parent=1 // pred_fallthru
      _
    // Predicated region
    $region14: #{tpu_custom_call.1} parent=1 // pred_check
      _
    $region15: #{tpu_custom_call.1} parent=1 // pred_check_branch
      %27 = sbr.rel (0) target = $region17
    $region16: #{tpu_custom_call.1} parent=1 // pred_region
      %28 = dma.done [#allocation3], 1664
    $region17: #{tpu_custom_call.1} parent=1 // pred_fallthru
      _
    %v29 = vld [vmem:[%s0] sm:$0xff]
    %v30 = vld [vmem:[%s0 + $0x8] sm:$0xff]
    %v31 = vlaneseq
    %v32 = vand.u32 %v31, 127
    %33 = vset.pattern.permute.xlu0 0
    %34 = vperm.xlu0 %33, %v29
    %v35 = vpop.permute.xlu0 %34
    %36 = vset.pattern.permute.xlu0 0
    %37 = vperm.xlu0 %36, %v30
    %v38 = vpop.permute.xlu0 %37
    %vm39 = vcmp.eq.s32.totalorder %v32, %v35
    %vm40 = vcmp.eq.s32.totalorder %v32, %v38
    %v41 = vsel %vm39, 1, 0
    %v42 = vsel %vm40, 1, 0
    %v43 = vcvt.s32.f32 %v41
    %v44 = vcvt.s32.f32 %v42
    %v45 = vld [vmem:[#allocation2] sm:$0xff]
    %v46 = vld [vmem:[#allocation2 + $0x8] sm:$0xff]
    %v47 = vld [vmem:[#allocation2 + $0x10] sm:$0xff]
    %v48 = vld [vmem:[#allocation2 + $0x18] sm:$0xff]
    %v49 = vld [vmem:[#allocation2 + $0x20] sm:$0xff]
    %v50 = vld [vmem:[#allocation2 + $0x28] sm:$0xff]
    %v51 = vld [vmem:[#allocation2 + $0x30] sm:$0xff]
    %v52 = vld [vmem:[#allocation2 + $0x38] sm:$0xff]
    %v53 = vld [vmem:[#allocation2 + $0x40] sm:$0xff]
    %v54 = vld [vmem:[#allocation2 + $0x48] sm:$0xff]
    %v55 = vld [vmem:[#allocation2 + $0x50] sm:$0xff]
    %v56 = vld [vmem:[#allocation2 + $0x58] sm:$0xff]
    %v57 = vld [vmem:[#allocation2 + $0x60] sm:$0xf]
    %vm58 = vcmask 818176
    %v60 = vsel %vm58, %v43, 0
    %v63 = vsel %vm58, %v44, 0
    %vm65 = vcmask 1043456
    %v67 = vsel %vm65, %v57, 0
    %69 = vmatprep.subr.mxu0 0.0
    %v70 = vand.u32 %v45, 4294901760
    %71 = vmatpush1.msra.mxu0 %v70
    %72 = vmatprep.subr.mxu0 0.0
    %v73 = vand.u32 %v46, 4294901760
    %74 = vmatpush1.msra.mxu0 %v73
    %75 = vmatprep.subr.mxu0 0.0
    %v76 = vand.u32 %v47, 4294901760
    %77 = vmatpush1.msra.mxu0 %v76
    %78 = vmatprep.subr.mxu0 0.0
    %v79 = vand.u32 %v48, 4294901760
    %80 = vmatpush1.msra.mxu0 %v79
    %81 = vmatprep.subr.mxu0 0.0
    %v82 = vand.u32 %v49, 4294901760
    %83 = vmatpush1.msra.mxu0 %v82
    %84 = vmatprep.subr.mxu0 0.0
    %v85 = vand.u32 %v50, 4294901760
    %86 = vmatpush1.msra.mxu0 %v85
    %87 = vmatprep.subr.mxu0 0.0
    %v88 = vand.u32 %v51, 4294901760
    %89 = vmatpush1.msra.mxu0 %v88
    %90 = vmatprep.subr.mxu0 0.0
    %v91 = vand.u32 %v52, 4294901760
    %92 = vmatpush1.msra.mxu0 %v91
    %93 = vmatprep.subr.mxu0 0.0
    %v94 = vand.u32 %v53, 4294901760
    %95 = vmatpush1.msra.mxu0 %v94
    %96 = vmatprep.subr.mxu0 0.0
    %v97 = vand.u32 %v54, 4294901760
    %98 = vmatpush1.msra.mxu0 %v97
    %99 = vmatprep.subr.mxu0 0.0
    %v100 = vand.u32 %v55, 4294901760
    %101 = vmatpush1.msra.mxu0 %v100
    %102 = vmatprep.subr.mxu0 0.0
    %v103 = vand.u32 %v56, 4294901760
    %104 = vmatpush1.msra.mxu0 %v103
    %105 = vmatprep.subr.mxu0 0.0
    %v106 = vand.u32 %v67, 4294901760
    %107 = vmatpush1.msra.mxu0 %v106
    %108 = vmatprep.subr.mxu0 0.0
    %109 = vmatpush1.msra.mxu0 0.0
    %110 = vmatprep.subr.mxu0 0.0
    %111 = vmatpush1.msra.mxu0 0.0
    %112 = vmatprep.subr.mxu0 0.0
    %113 = vmatpush1.msra.mxu0 0.0
    %114 = vmatprep.subr.mxu0 0.0
    %115 = vmatpush1.msra.mxu0 0.0
    %116 = vmatprep.subr.mxu0 0.0
    %117 = vmatpush1.msra.mxu0 0.0
    %118 = vmatprep.subr.mxu0 0.0
    %119 = vmatpush1.msra.mxu0 0.0
    %120 = vmatprep.subr.mxu0 0.0
    %121 = vmatpush1.msra.mxu0 0.0
    %122 = vmatprep.subr.mxu0 0.0
    %123 = vmatpush1.msra.mxu0 0.0
    %124 = vmatprep.subr.mxu0 0.0
    %125 = vmatpush1.msra.mxu0 0.0
    %126 = vmatprep.subr.mxu0 0.0
    %127 = vmatpush1.msra.mxu0 0.0
    %128 = vmatprep.subr.mxu0 0.0
    %129 = vmatpush1.msra.mxu0 0.0
    %130 = vmatprep.subr.mxu0 0.0
    %131 = vmatpush1.msra.mxu0 0.0
    %132 = vmatprep.subr.mxu0 0.0
    %133 = vmatpush1.msra.mxu0 0.0
    %134 = vmatprep.subr.mxu0 0.0
    %135 = vmatpush1.msra.mxu0 0.0
    %136 = vmatprep.subr.mxu0 0.0
    %137 = vmatpush1.msra.mxu0 0.0
    %138 = vmatprep.subr.mxu0 0.0
    %139 = vmatpush1.msra.mxu0 0.0
    %140 = vmatprep.subr.mxu0 0.0
    %141 = vmatpush1.msra.mxu0 0.0
    %142 = vmatprep.subr.mxu0 0.0
    %143 = vmatpush1.msra.mxu0 0.0
    %144 = vmatprep.subr.mxu0 0.0
    %145 = vmatpush1.msra.mxu0 0.0
    %146 = vmatprep.mubr.f32.mxu0 0.0
    %v147 = vand.u32 %v60, 4294901760
    %v148 = vsub.f32 %v60, %v147
    %v149 = vand.u32 %v148, 4294901760
    %v150 = vsub.f32 %v148, %v149
    %v151 = vand.u32 %v150, 4294901760
    %152 = vmatmul.mubr.f32.gmra.mrb[0].mxu0 %v151
    %v153 = vpop.f32.mrb[0].mxu0
    %v154 = vadd.f32 0.0, %v153
    %v155 = vpop.f32.mrb[0].mxu0
    %156 = vmatprep.mubr.f32.mxu0 0.0
    %v157 = vand.u32 %v63, 4294901760
    %v158 = vsub.f32 %v63, %v157
    %v159 = vand.u32 %v158, 4294901760
    %v160 = vsub.f32 %v158, %v159
    %v161 = vand.u32 %v160, 4294901760
    %162 = vmatmul.mubr.f32.gmra.mrb[0].mxu0 %v161
    %v163 = vpop.f32.mrb[0].mxu0
    %v164 = vadd.f32 0.0, %v163
    %v165 = vpop.f32.mrb[0].mxu0
    %166 = vdwg.mxu0
    %167 = vmatprep.subr.mxu0 0.0
    %v168 = vand.u32 %v45, 4294901760
    %v169 = vsub.f32 %v45, %v168
    %v170 = vand.u32 %v169, 4294901760
    %v171 = vsub.f32 %v169, %v170
    %v172 = vand.u32 %v171, 4294901760
    %173 = vmatpush1.msra.mxu0 %v172
    %174 = vmatprep.subr.mxu0 0.0
    %v175 = vand.u32 %v46, 4294901760
    %v176 = vsub.f32 %v46, %v175
    %v177 = vand.u32 %v176, 4294901760
    %v178 = vsub.f32 %v176, %v177
    %v179 = vand.u32 %v178, 4294901760
    %180 = vmatpush1.msra.mxu0 %v179
    %181 = vmatprep.subr.mxu0 0.0
    %v182 = vand.u32 %v47, 4294901760
    %v183 = vsub.f32 %v47, %v182
    %v184 = vand.u32 %v183, 4294901760
    %v185 = vsub.f32 %v183, %v184
    %v186 = vand.u32 %v185, 4294901760
    %187 = vmatpush1.msra.mxu0 %v186
    %188 = vmatprep.subr.mxu0 0.0
    %v189 = vand.u32 %v48, 4294901760
    %v190 = vsub.f32 %v48, %v189
    %v191 = vand.u32 %v190, 4294901760
    %v192 = vsub.f32 %v190, %v191
    %v193 = vand.u32 %v192, 4294901760
    %194 = vmatpush1.msra.mxu0 %v193
    %195 = vmatprep.subr.mxu0 0.0
    %v196 = vand.u32 %v49, 4294901760
    %v197 = vsub.f32 %v49, %v196
    %v198 = vand.u32 %v197, 4294901760
    %v199 = vsub.f32 %v197, %v198
    %v200 = vand.u32 %v199, 4294901760
    %201 = vmatpush1.msra.mxu0 %v200
    %202 = vmatprep.subr.mxu0 0.0
    %v203 = vand.u32 %v50, 4294901760
    %v204 = vsub.f32 %v50, %v203
    %v205 = vand.u32 %v204, 4294901760
    %v206 = vsub.f32 %v204, %v205
    %v207 = vand.u32 %v206, 4294901760
    %208 = vmatpush1.msra.mxu0 %v207
    %209 = vmatprep.subr.mxu0 0.0
    %v210 = vand.u32 %v51, 4294901760
    %v211 = vsub.f32 %v51, %v210
    %v212 = vand.u32 %v211, 4294901760
    %v213 = vsub.f32 %v211, %v212
    %v214 = vand.u32 %v213, 4294901760
    %215 = vmatpush1.msra.mxu0 %v214
    %216 = vmatprep.subr.mxu0 0.0
    %v217 = vand.u32 %v52, 4294901760
    %v218 = vsub.f32 %v52, %v217
    %v219 = vand.u32 %v218, 4294901760
    %v220 = vsub.f32 %v218, %v219
    %v221 = vand.u32 %v220, 4294901760
    %222 = vmatpush1.msra.mxu0 %v221
    %223 = vmatprep.subr.mxu0 0.0
    %v224 = vand.u32 %v53, 4294901760
    %v225 = vsub.f32 %v53, %v224
    %v226 = vand.u32 %v225, 4294901760
    %v227 = vsub.f32 %v225, %v226
    %v228 = vand.u32 %v227, 4294901760
    %229 = vmatpush1.msra.mxu0 %v228
    %230 = vmatprep.subr.mxu0 0.0
    %v231 = vand.u32 %v54, 4294901760
    %v232 = vsub.f32 %v54, %v231
    %v233 = vand.u32 %v232, 4294901760
    %v234 = vsub.f32 %v232, %v233
    %v235 = vand.u32 %v234, 4294901760
    %236 = vmatpush1.msra.mxu0 %v235
    %237 = vmatprep.subr.mxu0 0.0
    %v238 = vand.u32 %v55, 4294901760
    %v239 = vsub.f32 %v55, %v238
    %v240 = vand.u32 %v239, 4294901760
    %v241 = vsub.f32 %v239, %v240
    %v242 = vand.u32 %v241, 4294901760
    %243 = vmatpush1.msra.mxu0 %v242
    %244 = vmatprep.subr.mxu0 0.0
    %v245 = vand.u32 %v56, 4294901760
    %v246 = vsub.f32 %v56, %v245
    %v247 = vand.u32 %v246, 4294901760
    %v248 = vsub.f32 %v246, %v247
    %v249 = vand.u32 %v248, 4294901760
    %250 = vmatpush1.msra.mxu0 %v249
    %251 = vmatprep.subr.mxu0 0.0
    %v252 = vand.u32 %v67, 4294901760
    %v253 = vsub.f32 %v67, %v252
    %v254 = vand.u32 %v253, 4294901760
    %v255 = vsub.f32 %v253, %v254
    %v256 = vand.u32 %v255, 4294901760
    %257 = vmatpush1.msra.mxu0 %v256
    %258 = vmatprep.subr.mxu0 0.0
    %259 = vmatpush1.msra.mxu0 0.0
    %260 = vmatprep.subr.mxu0 0.0
    %261 = vmatpush1.msra.mxu0 0.0
    %262 = vmatprep.subr.mxu0 0.0
    %263 = vmatpush1.msra.mxu0 0.0
    %264 = vmatprep.subr.mxu0 0.0
    %265 = vmatpush1.msra.mxu0 0.0
    %266 = vmatprep.subr.mxu0 0.0
    %267 = vmatpush1.msra.mxu0 0.0
    %268 = vmatprep.subr.mxu0 0.0
    %269 = vmatpush1.msra.mxu0 0.0
    %270 = vmatprep.subr.mxu0 0.0
    %271 = vmatpush1.msra.mxu0 0.0
    %272 = vmatprep.subr.mxu0 0.0
    %273 = vmatpush1.msra.mxu0 0.0
    %274 = vmatprep.subr.mxu0 0.0
    %275 = vmatpush1.msra.mxu0 0.0
    %276 = vmatprep.subr.mxu0 0.0
    %277 = vmatpush1.msra.mxu0 0.0
    %278 = vmatprep.subr.mxu0 0.0
    %279 = vmatpush1.msra.mxu0 0.0
    %280 = vmatprep.subr.mxu0 0.0
    %281 = vmatpush1.msra.mxu0 0.0
    %282 = vmatprep.subr.mxu0 0.0
    %283 = vmatpush1.msra.mxu0 0.0
    %284 = vmatprep.subr.mxu0 0.0
    %285 = vmatpush1.msra.mxu0 0.0
    %286 = vmatprep.subr.mxu0 0.0
    %287 = vmatpush1.msra.mxu0 0.0
    %288 = vmatprep.subr.mxu0 0.0
    %289 = vmatpush1.msra.mxu0 0.0
    %290 = vmatprep.subr.mxu0 0.0
    %291 = vmatpush1.msra.mxu0 0.0
    %292 = vmatprep.subr.mxu0 0.0
    %293 = vmatpush1.msra.mxu0 0.0
    %294 = vmatprep.subr.mxu0 0.0
    %295 = vmatpush1.msra.mxu0 0.0
    %296 = vmatprep.mubr.f32.mxu0 0.0
    %v297 = vand.u32 %v60, 4294901760
    %298 = vmatmul.mubr.f32.gmra.mrb[0].mxu0 %v297
    %v299 = vpop.f32.mrb[0].mxu0
    %v300 = vadd.f32 %v154, %v299
    %v301 = vpop.f32.mrb[0].mxu0
    %302 = vmatprep.mubr.f32.mxu0 0.0
    %v303 = vand.u32 %v63, 4294901760
    %304 = vmatmul.mubr.f32.gmra.mrb[0].mxu0 %v303
    %v305 = vpop.f32.mrb[0].mxu0
    %v306 = vadd.f32 %v164, %v305
    %v307 = vpop.f32.mrb[0].mxu0
    %308 = vdwg.mxu0
    %309 = vmatprep.subr.mxu0 0.0
    %v310 = vand.u32 %v45, 4294901760
    %v311 = vsub.f32 %v45, %v310
    %312 = vmatpush1.msra.mxu0 %v311
    %313 = vmatprep.subr.mxu0 0.0
    %v314 = vand.u32 %v46, 4294901760
    %v315 = vsub.f32 %v46, %v314
    %316 = vmatpush1.msra.mxu0 %v315
    %317 = vmatprep.subr.mxu0 0.0
    %v318 = vand.u32 %v47, 4294901760
    %v319 = vsub.f32 %v47, %v318
    %320 = vmatpush1.msra.mxu0 %v319
    %321 = vmatprep.subr.mxu0 0.0
    %v322 = vand.u32 %v48, 4294901760
    %v323 = vsub.f32 %v48, %v322
    %324 = vmatpush1.msra.mxu0 %v323
    %325 = vmatprep.subr.mxu0 0.0
    %v326 = vand.u32 %v49, 4294901760
    %v327 = vsub.f32 %v49, %v326
    %328 = vmatpush1.msra.mxu0 %v327
    %329 = vmatprep.subr.mxu0 0.0
    %v330 = vand.u32 %v50, 4294901760
    %v331 = vsub.f32 %v50, %v330
    %332 = vmatpush1.msra.mxu0 %v331
    %333 = vmatprep.subr.mxu0 0.0
    %v334 = vand.u32 %v51, 4294901760
    %v335 = vsub.f32 %v51, %v334
    %336 = vmatpush1.msra.mxu0 %v335
    %337 = vmatprep.subr.mxu0 0.0
    %v338 = vand.u32 %v52, 4294901760
    %v339 = vsub.f32 %v52, %v338
    %340 = vmatpush1.msra.mxu0 %v339
    %341 = vmatprep.subr.mxu0 0.0
    %v342 = vand.u32 %v53, 4294901760
    %v343 = vsub.f32 %v53, %v342
    %344 = vmatpush1.msra.mxu0 %v343
    %345 = vmatprep.subr.mxu0 0.0
    %v346 = vand.u32 %v54, 4294901760
    %v347 = vsub.f32 %v54, %v346
    %348 = vmatpush1.msra.mxu0 %v347
    %349 = vmatprep.subr.mxu0 0.0
    %v350 = vand.u32 %v55, 4294901760
    %v351 = vsub.f32 %v55, %v350
    %352 = vmatpush1.msra.mxu0 %v351
    %353 = vmatprep.subr.mxu0 0.0
    %v354 = vand.u32 %v56, 4294901760
    %v355 = vsub.f32 %v56, %v354
    %356 = vmatpush1.msra.mxu0 %v355
    %357 = vmatprep.subr.mxu0 0.0
    %v358 = vand.u32 %v67, 4294901760
    %v359 = vsub.f32 %v67, %v358
    %360 = vmatpush1.msra.mxu0 %v359
    %361 = vmatprep.subr.mxu0 0.0
    %362 = vmatpush1.msra.mxu0 0.0
    %363 = vmatprep.subr.mxu0 0.0
    %364 = vmatpush1.msra.mxu0 0.0
    %365 = vmatprep.subr.mxu0 0.0
    %366 = vmatpush1.msra.mxu0 0.0
    %367 = vmatprep.subr.mxu0 0.0
    %368 = vmatpush1.msra.mxu0 0.0
    %369 = vmatprep.subr.mxu0 0.0
    %370 = vmatpush1.msra.mxu0 0.0
    %371 = vmatprep.subr.mxu0 0.0
    %372 = vmatpush1.msra.mxu0 0.0
    %373 = vmatprep.subr.mxu0 0.0
    %374 = vmatpush1.msra.mxu0 0.0
    %375 = vmatprep.subr.mxu0 0.0
    %376 = vmatpush1.msra.mxu0 0.0
    %377 = vmatprep.subr.mxu0 0.0
    %378 = vmatpush1.msra.mxu0 0.0
    %379 = vmatprep.subr.mxu0 0.0
    %380 = vmatpush1.msra.mxu0 0.0
    %381 = vmatprep.subr.mxu0 0.0
    %382 = vmatpush1.msra.mxu0 0.0
    %383 = vmatprep.subr.mxu0 0.0
    %384 = vmatpush1.msra.mxu0 0.0
    %385 = vmatprep.subr.mxu0 0.0
    %386 = vmatpush1.msra.mxu0 0.0
    %387 = vmatprep.subr.mxu0 0.0
    %388 = vmatpush1.msra.mxu0 0.0
    %389 = vmatprep.subr.mxu0 0.0
    %390 = vmatpush1.msra.mxu0 0.0
    %391 = vmatprep.subr.mxu0 0.0
    %392 = vmatpush1.msra.mxu0 0.0
    %393 = vmatprep.subr.mxu0 0.0
    %394 = vmatpush1.msra.mxu0 0.0
    %395 = vmatprep.subr.mxu0 0.0
    %396 = vmatpush1.msra.mxu0 0.0
    %397 = vmatprep.subr.mxu0 0.0
    %398 = vmatpush1.msra.mxu0 0.0
    %399 = vmatprep.mubr.f32.mxu0 0.0
    %v400 = vand.u32 %v60, 4294901760
    %v401 = vsub.f32 %v60, %v400
    %402 = vmatmul.mubr.f32.gmra.mrb[0].mxu0 %v401
    %v403 = vpop.f32.mrb[0].mxu0
    %v404 = vadd.f32 %v300, %v403
    %v405 = vpop.f32.mrb[0].mxu0
    %406 = vmatprep.mubr.f32.mxu0 0.0
    %v407 = vand.u32 %v63, 4294901760
    %v408 = vsub.f32 %v63, %v407
    %409 = vmatmul.mubr.f32.gmra.mrb[0].mxu0 %v408
    %v410 = vpop.f32.mrb[0].mxu0
    %v411 = vadd.f32 %v306, %v410
    %v412 = vpop.f32.mrb[0].mxu0
    %413 = vdwg.mxu0
    %414 = vmatprep.subr.mxu0 0.0
    %v415 = vand.u32 %v45, 4294901760
    %416 = vmatpush1.msra.mxu0 %v415
    %417 = vmatprep.subr.mxu0 0.0
    %v418 = vand.u32 %v46, 4294901760
    %419 = vmatpush1.msra.mxu0 %v418
    %420 = vmatprep.subr.mxu0 0.0
    %v421 = vand.u32 %v47, 4294901760
    %422 = vmatpush1.msra.mxu0 %v421
    %423 = vmatprep.subr.mxu0 0.0
    %v424 = vand.u32 %v48, 4294901760
    %425 = vmatpush1.msra.mxu0 %v424
    %426 = vmatprep.subr.mxu0 0.0
    %v427 = vand.u32 %v49, 4294901760
    %428 = vmatpush1.msra.mxu0 %v427
    %429 = vmatprep.subr.mxu0 0.0
    %v430 = vand.u32 %v50, 4294901760
    %431 = vmatpush1.msra.mxu0 %v430
    %432 = vmatprep.subr.mxu0 0.0
    %v433 = vand.u32 %v51, 4294901760
    %434 = vmatpush1.msra.mxu0 %v433
    %435 = vmatprep.subr.mxu0 0.0
    %v436 = vand.u32 %v52, 4294901760
    %437 = vmatpush1.msra.mxu0 %v436
    %438 = vmatprep.subr.mxu0 0.0
    %v439 = vand.u32 %v53, 4294901760
    %440 = vmatpush1.msra.mxu0 %v439
    %441 = vmatprep.subr.mxu0 0.0
    %v442 = vand.u32 %v54, 4294901760
    %443 = vmatpush1.msra.mxu0 %v442
    %444 = vmatprep.subr.mxu0 0.0
    %v445 = vand.u32 %v55, 4294901760
    %446 = vmatpush1.msra.mxu0 %v445
    %447 = vmatprep.subr.mxu0 0.0
    %v448 = vand.u32 %v56, 4294901760
    %449 = vmatpush1.msra.mxu0 %v448
    %450 = vmatprep.subr.mxu0 0.0
    %v451 = vand.u32 %v67, 4294901760
    %452 = vmatpush1.msra.mxu0 %v451
    %453 = vmatprep.subr.mxu0 0.0
    %454 = vmatpush1.msra.mxu0 0.0
    %455 = vmatprep.subr.mxu0 0.0
    %456 = vmatpush1.msra.mxu0 0.0
    %457 = vmatprep.subr.mxu0 0.0
    %458 = vmatpush1.msra.mxu0 0.0
    %459 = vmatprep.subr.mxu0 0.0
    %460 = vmatpush1.msra.mxu0 0.0
    %461 = vmatprep.subr.mxu0 0.0
    %462 = vmatpush1.msra.mxu0 0.0
    %463 = vmatprep.subr.mxu0 0.0
    %464 = vmatpush1.msra.mxu0 0.0
    %465 = vmatprep.subr.mxu0 0.0
    %466 = vmatpush1.msra.mxu0 0.0
    %467 = vmatprep.subr.mxu0 0.0
    %468 = vmatpush1.msra.mxu0 0.0
    %469 = vmatprep.subr.mxu0 0.0
    %470 = vmatpush1.msra.mxu0 0.0
    %471 = vmatprep.subr.mxu0 0.0
    %472 = vmatpush1.msra.mxu0 0.0
    %473 = vmatprep.subr.mxu0 0.0
    %474 = vmatpush1.msra.mxu0 0.0
    %475 = vmatprep.subr.mxu0 0.0
    %476 = vmatpush1.msra.mxu0 0.0
    %477 = vmatprep.subr.mxu0 0.0
    %478 = vmatpush1.msra.mxu0 0.0
    %479 = vmatprep.subr.mxu0 0.0
    %480 = vmatpush1.msra.mxu0 0.0
    %481 = vmatprep.subr.mxu0 0.0
    %482 = vmatpush1.msra.mxu0 0.0
    %483 = vmatprep.subr.mxu0 0.0
    %484 = vmatpush1.msra.mxu0 0.0
    %485 = vmatprep.subr.mxu0 0.0
    %486 = vmatpush1.msra.mxu0 0.0
    %487 = vmatprep.subr.mxu0 0.0
    %488 = vmatpush1.msra.mxu0 0.0
    %489 = vmatprep.subr.mxu0 0.0
    %490 = vmatpush1.msra.mxu0 0.0
    %491 = vmatprep.mubr.f32.mxu0 0.0
    %v492 = vand.u32 %v60, 4294901760
    %v493 = vsub.f32 %v60, %v492
    %v494 = vand.u32 %v493, 4294901760
    %495 = vmatmul.mubr.f32.gmra.mrb[0].mxu0 %v494
    %v496 = vpop.f32.mrb[0].mxu0
    %v497 = vadd.f32 %v404, %v496
    %v498 = vpop.f32.mrb[0].mxu0
    %499 = vmatprep.mubr.f32.mxu0 0.0
    %v500 = vand.u32 %v63, 4294901760
    %v501 = vsub.f32 %v63, %v500
    %v502 = vand.u32 %v501, 4294901760
    %503 = vmatmul.mubr.f32.gmra.mrb[0].mxu0 %v502
    %v504 = vpop.f32.mrb[0].mxu0
    %v505 = vadd.f32 %v411, %v504
    %v506 = vpop.f32.mrb[0].mxu0
    %507 = vdwg.mxu0
    %508 = vmatprep.subr.mxu0 0.0
    %v509 = vand.u32 %v45, 4294901760
    %v510 = vsub.f32 %v45, %v509
    %v511 = vand.u32 %v510, 4294901760
    %512 = vmatpush1.msra.mxu0 %v511
    %513 = vmatprep.subr.mxu0 0.0
    %v514 = vand.u32 %v46, 4294901760
    %v515 = vsub.f32 %v46, %v514
    %v516 = vand.u32 %v515, 4294901760
    %517 = vmatpush1.msra.mxu0 %v516
    %518 = vmatprep.subr.mxu0 0.0
    %v519 = vand.u32 %v47, 4294901760
    %v520 = vsub.f32 %v47, %v519
    %v521 = vand.u32 %v520, 4294901760
    %522 = vmatpush1.msra.mxu0 %v521
    %523 = vmatprep.subr.mxu0 0.0
    %v524 = vand.u32 %v48, 4294901760
    %v525 = vsub.f32 %v48, %v524
    %v526 = vand.u32 %v525, 4294901760
    %527 = vmatpush1.msra.mxu0 %v526
    %528 = vmatprep.subr.mxu0 0.0
    %v529 = vand.u32 %v49, 4294901760
    %v530 = vsub.f32 %v49, %v529
    %v531 = vand.u32 %v530, 4294901760
    %532 = vmatpush1.msra.mxu0 %v531
    %533 = vmatprep.subr.mxu0 0.0
    %v534 = vand.u32 %v50, 4294901760
    %v535 = vsub.f32 %v50, %v534
    %v536 = vand.u32 %v535, 4294901760
    %537 = vmatpush1.msra.mxu0 %v536
    %538 = vmatprep.subr.mxu0 0.0
    %v539 = vand.u32 %v51, 4294901760
    %v540 = vsub.f32 %v51, %v539
    %v541 = vand.u32 %v540, 4294901760
    %542 = vmatpush1.msra.mxu0 %v541
    %543 = vmatprep.subr.mxu0 0.0
    %v544 = vand.u32 %v52, 4294901760
    %v545 = vsub.f32 %v52, %v544
    %v546 = vand.u32 %v545, 4294901760
    %547 = vmatpush1.msra.mxu0 %v546
    %548 = vmatprep.subr.mxu0 0.0
    %v549 = vand.u32 %v53, 4294901760
    %v550 = vsub.f32 %v53, %v549
    %v551 = vand.u32 %v550, 4294901760
    %552 = vmatpush1.msra.mxu0 %v551
    %553 = vmatprep.subr.mxu0 0.0
    %v554 = vand.u32 %v54, 4294901760
    %v555 = vsub.f32 %v54, %v554
    %v556 = vand.u32 %v555, 4294901760
    %557 = vmatpush1.msra.mxu0 %v556
    %558 = vmatprep.subr.mxu0 0.0
    %v559 = vand.u32 %v55, 4294901760
    %v560 = vsub.f32 %v55, %v559
    %v561 = vand.u32 %v560, 4294901760
    %562 = vmatpush1.msra.mxu0 %v561
    %563 = vmatprep.subr.mxu0 0.0
    %v564 = vand.u32 %v56, 4294901760
    %v565 = vsub.f32 %v56, %v564
    %v566 = vand.u32 %v565, 4294901760
    %567 = vmatpush1.msra.mxu0 %v566
    %568 = vmatprep.subr.mxu0 0.0
    %v569 = vand.u32 %v67, 4294901760
    %v570 = vsub.f32 %v67, %v569
    %v571 = vand.u32 %v570, 4294901760
    %572 = vmatpush1.msra.mxu0 %v571
    %573 = vmatprep.subr.mxu0 0.0
    %574 = vmatpush1.msra.mxu0 0.0
    %575 = vmatprep.subr.mxu0 0.0
    %576 = vmatpush1.msra.mxu0 0.0
    %577 = vmatprep.subr.mxu0 0.0
    %578 = vmatpush1.msra.mxu0 0.0
    %579 = vmatprep.subr.mxu0 0.0
    %580 = vmatpush1.msra.mxu0 0.0
    %581 = vmatprep.subr.mxu0 0.0
    %582 = vmatpush1.msra.mxu0 0.0
    %583 = vmatprep.subr.mxu0 0.0
    %584 = vmatpush1.msra.mxu0 0.0
    %585 = vmatprep.subr.mxu0 0.0
    %586 = vmatpush1.msra.mxu0 0.0
    %587 = vmatprep.subr.mxu0 0.0
    %588 = vmatpush1.msra.mxu0 0.0
    %589 = vmatprep.subr.mxu0 0.0
    %590 = vmatpush1.msra.mxu0 0.0
    %591 = vmatprep.subr.mxu0 0.0
    %592 = vmatpush1.msra.mxu0 0.0
    %593 = vmatprep.subr.mxu0 0.0
    %594 = vmatpush1.msra.mxu0 0.0
    %595 = vmatprep.subr.mxu0 0.0
    %596 = vmatpush1.msra.mxu0 0.0
    %597 = vmatprep.subr.mxu0 0.0
    %598 = vmatpush1.msra.mxu0 0.0
    %599 = vmatprep.subr.mxu0 0.0
    %600 = vmatpush1.msra.mxu0 0.0
    %601 = vmatprep.subr.mxu0 0.0
    %602 = vmatpush1.msra.mxu0 0.0
    %603 = vmatprep.subr.mxu0 0.0
    %604 = vmatpush1.msra.mxu0 0.0
    %605 = vmatprep.subr.mxu0 0.0
    %606 = vmatpush1.msra.mxu0 0.0
    %607 = vmatprep.subr.mxu0 0.0
    %608 = vmatpush1.msra.mxu0 0.0
    %609 = vmatprep.subr.mxu0 0.0
    %610 = vmatpush1.msra.mxu0 0.0
    %611 = vmatprep.mubr.f32.mxu0 0.0
    %v612 = vand.u32 %v60, 4294901760
    %613 = vmatmul.mubr.f32.gmra.mrb[0].mxu0 %v612
    %v614 = vpop.f32.mrb[0].mxu0
    %v615 = vadd.f32 %v497, %v614
    %v616 = vpop.f32.mrb[0].mxu0
    %617 = vmatprep.mubr.f32.mxu0 0.0
    %v618 = vand.u32 %v63, 4294901760
    %619 = vmatmul.mubr.f32.gmra.mrb[0].mxu0 %v618
    %v620 = vpop.f32.mrb[0].mxu0
    %v621 = vadd.f32 %v505, %v620
    %v622 = vpop.f32.mrb[0].mxu0
    %623 = vdwg.mxu0
    %624 = vmatprep.subr.mxu0 0.0
    %v625 = vand.u32 %v45, 4294901760
    %626 = vmatpush1.msra.mxu0 %v625
    %627 = vmatprep.subr.mxu0 0.0
    %v628 = vand.u32 %v46, 4294901760
    %629 = vmatpush1.msra.mxu0 %v628
    %630 = vmatprep.subr.mxu0 0.0
    %v631 = vand.u32 %v47, 4294901760
    %632 = vmatpush1.msra.mxu0 %v631
    %633 = vmatprep.subr.mxu0 0.0
    %v634 = vand.u32 %v48, 4294901760
    %635 = vmatpush1.msra.mxu0 %v634
    %636 = vmatprep.subr.mxu0 0.0
    %v637 = vand.u32 %v49, 4294901760
    %638 = vmatpush1.msra.mxu0 %v637
    %639 = vmatprep.subr.mxu0 0.0
    %v640 = vand.u32 %v50, 4294901760
    %641 = vmatpush1.msra.mxu0 %v640
    %642 = vmatprep.subr.mxu0 0.0
    %v643 = vand.u32 %v51, 4294901760
    %644 = vmatpush1.msra.mxu0 %v643
    %645 = vmatprep.subr.mxu0 0.0
    %v646 = vand.u32 %v52, 4294901760
    %647 = vmatpush1.msra.mxu0 %v646
    %648 = vmatprep.subr.mxu0 0.0
    %v649 = vand.u32 %v53, 4294901760
    %650 = vmatpush1.msra.mxu0 %v649
    %651 = vmatprep.subr.mxu0 0.0
    %v652 = vand.u32 %v54, 4294901760
    %653 = vmatpush1.msra.mxu0 %v652
    %654 = vmatprep.subr.mxu0 0.0
    %v655 = vand.u32 %v55, 4294901760
    %656 = vmatpush1.msra.mxu0 %v655
    %657 = vmatprep.subr.mxu0 0.0
    %v658 = vand.u32 %v56, 4294901760
    %659 = vmatpush1.msra.mxu0 %v658
    %660 = vmatprep.subr.mxu0 0.0
    %v661 = vand.u32 %v67, 4294901760
    %662 = vmatpush1.msra.mxu0 %v661
    %663 = vmatprep.subr.mxu0 0.0
    %664 = vmatpush1.msra.mxu0 0.0
    %665 = vmatprep.subr.mxu0 0.0
    %666 = vmatpush1.msra.mxu0 0.0
    %667 = vmatprep.subr.mxu0 0.0
    %668 = vmatpush1.msra.mxu0 0.0
    %669 = vmatprep.subr.mxu0 0.0
    %670 = vmatpush1.msra.mxu0 0.0
    %671 = vmatprep.subr.mxu0 0.0
    %672 = vmatpush1.msra.mxu0 0.0
    %673 = vmatprep.subr.mxu0 0.0
    %674 = vmatpush1.msra.mxu0 0.0
    %675 = vmatprep.subr.mxu0 0.0
    %676 = vmatpush1.msra.mxu0 0.0
    %677 = vmatprep.subr.mxu0 0.0
    %678 = vmatpush1.msra.mxu0 0.0
    %679 = vmatprep.subr.mxu0 0.0
    %680 = vmatpush1.msra.mxu0 0.0
    %681 = vmatprep.subr.mxu0 0.0
    %682 = vmatpush1.msra.mxu0 0.0
    %683 = vmatprep.subr.mxu0 0.0
    %684 = vmatpush1.msra.mxu0 0.0
    %685 = vmatprep.subr.mxu0 0.0
    %686 = vmatpush1.msra.mxu0 0.0
    %687 = vmatprep.subr.mxu0 0.0
    %688 = vmatpush1.msra.mxu0 0.0
    %689 = vmatprep.subr.mxu0 0.0
    %690 = vmatpush1.msra.mxu0 0.0
    %691 = vmatprep.subr.mxu0 0.0
    %692 = vmatpush1.msra.mxu0 0.0
    %693 = vmatprep.subr.mxu0 0.0
    %694 = vmatpush1.msra.mxu0 0.0
    %695 = vmatprep.subr.mxu0 0.0
    %696 = vmatpush1.msra.mxu0 0.0
    %697 = vmatprep.subr.mxu0 0.0
    %698 = vmatpush1.msra.mxu0 0.0
    %699 = vmatprep.subr.mxu0 0.0
    %700 = vmatpush1.msra.mxu0 0.0
    %701 = vmatprep.mubr.f32.mxu0 0.0
    %v702 = vand.u32 %v60, 4294901760
    %703 = vmatmul.mubr.f32.gmra.mrb[0].mxu0 %v702
    %v704 = vpop.f32.mrb[0].mxu0
    %v705 = vadd.f32 %v615, %v704
    %v706 = vpop.f32.mrb[0].mxu0
    %707 = vmatprep.mubr.f32.mxu0 0.0
    %v708 = vand.u32 %v63, 4294901760
    %709 = vmatmul.mubr.f32.gmra.mrb[0].mxu0 %v708
    %v710 = vpop.f32.mrb[0].mxu0
    %v711 = vadd.f32 %v621, %v710
    %v712 = vpop.f32.mrb[0].mxu0
    %713 = vdwg.mxu0
    %v714 = vld [vmem:[%s2] sm:$0xff]
    %v715 = vld [vmem:[%s2 + $0x8] sm:$0xff]
    %v716 = vmul.f32 %v705, %v714
    %v717 = vmul.f32 %v711, %v715
    %718 = vst [vmem:[#allocation5] sm:$0xff] %v716
    %719 = vst [vmem:[#allocation5 + $0x8] sm:$0xff] %v717
    // Predicated region
    $region18: #{tpu_custom_call.1} parent=1 // pred_check
      _
    $region19: #{tpu_custom_call.1} parent=1 // pred_check_branch
      %721 = sbr.rel (0) target = $region21
    $region20: #{tpu_custom_call.1} parent=1 // pred_region
      %s723 = ssub.s32 256, 256
      %724 = vsyncadd [#allocation4], %s723
      %s725 = sshll.u32 [#allocation5], 4
      %s726 = int_to_ptr.vmem [resolvable:$true] %s725
      %731 = dma.vmem_to_hbm [thread:$0]  %s726, 256, %s3, [#allocation4], 128, 128, 8
    $region21: #{tpu_custom_call.1} parent=1 // pred_fallthru
      _
    // Predicated region
    $region22: #{tpu_custom_call.1} parent=1 // pred_check
      _
    $region23: #{tpu_custom_call.1} parent=1 // pred_check_branch
      %733 = sbr.rel (0) target = $region25
    $region24: #{tpu_custom_call.1} parent=1 // pred_region
      %734 = dma.done [#allocation4], 256
    $region25: #{tpu_custom_call.1} parent=1 // pred_fallthru
      _
    %735 = vsyncpa [#allocation3], 1
    %736 = vsyncpa [#allocation4], 1

</llo_original>
